<compile_context>
chip_gen: v5e
topology: v5e:2x2
jax: 0.10.0
libtpu: 0.0.40
codegen_flags: <defaults>
</compile_context>

<pallas_src>
import functools

import jax
import jax.numpy as jnp
from jax.experimental import pallas as pl
from jax.experimental.pallas import tpu as pltpu

_LANE = 128
_TARGET_BLOCK_BYTES = 1 << 20  # ~1 MiB per buffer (x in/out, x double-buffer ≈ 4 MiB VMEM)


def _sublane_multiple(dtype):
    itemsize = jnp.dtype(dtype).itemsize
    return max(8, 32 // max(1, itemsize))       # f32: 8, bf16: 16, int8/fp8: 32


def _pick_block_rows(rows, row_bytes, dtype):
    m = _sublane_multiple(dtype)
    br = max(1, _TARGET_BLOCK_BYTES // max(1, row_bytes))
    if br >= rows:
        return rows                             # one full block: always a legal shape
    br = max(m, (br // m) * m)                  # keep dtype-tiling-legal block rows
    return min(br, rows)


# ----------------------------------------------------------------------------
# stride == 1 : elementwise x * 0.0 on lane-dense tiles
# ----------------------------------------------------------------------------
def _zero_kernel(x_ref, o_ref):
    # Keep the read + multiply (not a constant-zero store) so NaN/Inf and
    # signed zeros propagate exactly like the PyTorch module.
    o_ref[...] = x_ref[...] * 0.0


def _zero_same_shape(x):
    """x * 0.0 via a tiled, pipelined Pallas kernel; preserves x's shape."""
    orig_shape = x.shape
    total = x.size
    if total == 0:
        return x * 0.0

    if total % _LANE == 0:
        # Lane-dense slab; widen rows up to 1024 lanes when it divides evenly
        # (slightly fewer per-row store issues, DMA stays fully contiguous).
        width = _LANE
        while width * 2 <= 1024 and total % (width * 2) == 0:
            width *= 2
        x2 = x.reshape(total // width, width)           # free reshape
    elif x.ndim >= 2:
        x2 = x.reshape(-1, orig_shape[-1])              # full trailing dim: legal block
    else:
        x2 = x.reshape(1, total)

    rows, width = x2.shape
    itemsize = jnp.dtype(x2.dtype).itemsize
    brows = _pick_block_rows(rows, width * itemsize, x2.dtype)

    out2 = pl.pallas_call(
        _zero_kernel,
        out_shape=jax.ShapeDtypeStruct((rows, width), x2.dtype),
        grid=(pl.cdiv(rows, brows),),
        in_specs=[pl.BlockSpec((brows, width), lambda i: (i, 0))],
        out_specs=pl.BlockSpec((brows, width), lambda i: (i, 0)),
        compiler_params=pltpu.CompilerParams(
            dimension_semantics=("parallel",)),
        cost_estimate=pl.CostEstimate(
            flops=total, transcendentals=0,
            bytes_accessed=2 * total * itemsize),
    )(x2)
    return out2.reshape(orig_shape)


# ----------------------------------------------------------------------------
# stride > 1 : subsample fused into the kernel (strided pl.ds loads)
# ----------------------------------------------------------------------------
def _zero_strided_kernel(x_ref, o_ref, *, stride, h_out, w_out):
    # In-kernel spatial subsampling: strided loads on the sublane (H) and
    # lane (W) axes pick x[..., ::stride, ::stride]; then multiply by 0.0.
    sub = x_ref[:, pl.ds(0, h_out, stride=stride), pl.ds(0, w_out, stride=stride)]
    o_ref[...] = sub * 0.0


def _zero_strided_fused(x, stride):
    n, c, h, w = x.shape
    h_out = -(-h // stride)                     # ceil-div == len(range(0, h, stride))
    w_out = -(-w // stride)
    nc = n * c
    x3 = x.reshape(nc, h, w)                    # free reshape

    itemsize = jnp.dtype(x.dtype).itemsize
    # Blocks cover whole (H, W) images (legal full-dim minor block shape, fully
    # contiguous input DMA); the leading N*C axis is tiled to ~1 MiB blocks and
    # pipelined across a long "parallel" grid.
    bnc = max(1, min(nc, _TARGET_BLOCK_BYTES // max(1, h * w * itemsize)))

    kernel = functools.partial(
        _zero_strided_kernel, stride=stride, h_out=h_out, w_out=w_out)

    out3 = pl.pallas_call(
        kernel,
        out_shape=jax.ShapeDtypeStruct((nc, h_out, w_out), x.dtype),
        grid=(pl.cdiv(nc, bnc),),
        in_specs=[pl.BlockSpec((bnc, h, w), lambda i: (i, 0, 0))],
        out_specs=pl.BlockSpec((bnc, h_out, w_out), lambda i: (i, 0, 0)),
        compiler_params=pltpu.CompilerParams(
            dimension_semantics=("parallel",)),
        cost_estimate=pl.CostEstimate(
            flops=nc * h_out * w_out, transcendentals=0,
            bytes_accessed=(nc * h * w + nc * h_out * w_out) * itemsize),
    )(x3)
    return out3.reshape(n, c, h_out, w_out)


# ----------------------------------------------------------------------------
# Public forward
# ----------------------------------------------------------------------------
def zero_forward(x, stride):
    """Zero module forward.  x: (N, C, H, W)."""
    if stride == 1:
        return _zero_same_shape(x)
    try:
        # Preferred: stride fused into the kernel -> one contiguous full-tensor
        # read + a 1/stride^2-sized write, no x_sel HBM round trip.
        return _zero_strided_fused(x, stride)
    except Exception:
        # Fallback if the strided in-kernel load does not lower for this
        # dtype/shape: materialize the subsample with XLA, then zero it with
        # the tiled kernel (one extra HBM round trip, still correct).
        return _zero_same_shape(x[:, :, ::stride, ::stride])


if __name__ == "__main__":
    key = jax.random.PRNGKey(0)
    N, C, H, W = 2, 4, 16, 16
    x = jax.random.normal(key, (N, C, H, W), jnp.float32)

    # stride == 1 path
    out1 = jax.block_until_ready(zero_forward(x, stride=1))
    ref1 = x * 0.0
    assert out1.shape == ref1.shape, out1.shape
    assert bool(jnp.all(out1 == ref1))

    # stride == 2 path
    out2 = jax.block_until_ready(zero_forward(x, stride=2))
    ref2 = x[:, :, ::2, ::2] * 0.0
    assert out2.shape == ref2.shape, out2.shape
    assert bool(jnp.all(out2 == ref2))

    print("KERNEL_OK")
</pallas_src>

<mosaic_0001>
module attributes {stable_mosaic.version = 11 : i64} {
  func.func @_zero_kernel(%arg0: i32, %arg1: memref<2x1024xf32, #tpu.memory_space<vmem>>, %arg2: memref<2x1024xf32, #tpu.memory_space<vmem>>) attributes {dimension_semantics = [#tpu.dimension_semantics<parallel>], iteration_bounds = array<i64: 1>, scalar_prefetch = 0 : i64, scratch_operands = 0 : i64, tpu.core_type = #tpu.core_type<tc>, window_params = [{transform_indices = @transform_0, window_bounds = array<i64: 2, 1024>}, {transform_indices = @transform_1, window_bounds = array<i64: 2, 1024>}]} {
    %c0 = arith.constant 0 : index
    %c0_0 = arith.constant 0 : index
    %0 = vector.load %arg1[%c0, %c0_0] : memref<2x1024xf32, #tpu.memory_space<vmem>>, vector<2x1024xf32>
    %cst = arith.constant 0.000000e+00 : f32
    %1 = vector.broadcast %cst : f32 to vector<2x1024xf32>
    %2 = arith.mulf %0, %1 : vector<2x1024xf32>
    %c0_1 = arith.constant 0 : index
    %c0_2 = arith.constant 0 : index
    %3 = vector.load %arg2[%c0_1, %c0_2] : memref<2x1024xf32, #tpu.memory_space<vmem>>, vector<2x1024xf32>
    tpu.vector_store %arg2[%c0_1, %c0_2], %2 {strides = array<i32>} : memref<2x1024xf32, #tpu.memory_space<vmem>>, vector<2x1024xf32>,
    return
  }
  func.func @transform_0(%arg0: i32) -> (i32, i32) {
    %c0_i32 = arith.constant 0 : i32
    %c0_i32_0 = arith.constant 0 : i32
    return %arg0, %c0_i32 : i32, i32
  }
  func.func @transform_1(%arg0: i32) -> (i32, i32) {
    %c0_i32 = arith.constant 0 : i32
    %c0_i32_0 = arith.constant 0 : i32
    return %arg0, %c0_i32 : i32, i32
  }
}

</mosaic_0001>

<llo_original>
// kernel: tpu_custom_call.1
$region0: #{tpu_custom_call.1}
  #allocation0 [shape = 'u32[]', space=smem, size = 0x4, offset = 0x4, fixed_abs, tag = 'smem constant byte address 0x4 - core index']
  #allocation1 [shape = 'u32[72,128]{1,0:T(1,128)}', space=vmem, size = 0x9000, scoped, tag = 'internal scratch']
  %s0 = inlined_call_operand.hbm [shape: f32[2,1024], index: 0, kind: input, shape index: {}]
  %s1 = inlined_call_operand.hbm [shape: f32[2,1024], index: 1, kind: output, shape index: {}]
  %s2 = sld [smem:[#allocation0]]
  $region18: #{tpu_custom_call.1} parent=0
    _
  %s4 = ssub.s32 1, %s2
  %s5 = scalar_select 0, %s4, %s2
  $region1: #{tpu_custom_call.1} parent=0
    #allocation2 [shape = 'u8[8192]{0}', space=vmem, size = 0x2000, scoped, tag = 'input window, operand 0, single buffered']
    #allocation3 [shape = 's32[1]{0}', space=sflag, size = 0x4, scoped, tag = 'scoped memory for tpu_custom_call.1']
    #allocation4 [shape = 's32[1]{0}', space=sflag, size = 0x4, scoped, tag = 'scoped memory for tpu_custom_call.1']
    #allocation5 [shape = 'u8[8192]{0}', space=vmem, size = 0x2000, scoped, tag = 'output window, operand 0, single buffered']
    %6 = vsyncpa [#allocation3], 0
    %7 = vsyncpa [#allocation4], 0
    // Predicated region
    $region2: #{tpu_custom_call.1} parent=1 // pred_check
      _
    $region3: #{tpu_custom_call.1} parent=1 // pred_check_branch
      %9 = sbr.rel (0) target = $region5
    $region4: #{tpu_custom_call.1} parent=1 // pred_region
      %11 = vsyncadd [#allocation3], 0
      %s13 = sshll.u32 %s0, 4
      %s14 = int_to_ptr.hbm [resolvable:$true] %s13
      %s15 = sshll.u32 [#allocation2], 4
      %s16 = int_to_ptr.vmem [resolvable:$true] %s15
      %18 = dma.hbm_to_vmem [thread:$0]  %s14, 256, %s16, [#allocation3]
    $region5: #{tpu_custom_call.1} parent=1 // pred_fallthru
      _
    // Predicated region
    $region6: #{tpu_custom_call.1} parent=1 // pred_check
      _
    $region7: #{tpu_custom_call.1} parent=1 // pred_check_branch
      %20 = sbr.rel (0) target = $region9
    $region8: #{tpu_custom_call.1} parent=1 // pred_region
      %22 = dma.done [#allocation3], 256
    $region9: #{tpu_custom_call.1} parent=1 // pred_fallthru
      _
    %v23 = vld [vmem:[#allocation2] sm:$0xff]
    %v24 = vld [vmem:[#allocation2 + $0x8] sm:$0xff]
    %v25 = vmul.f32 %v23, 0.0
    %v26 = vmul.f32 %v24, 0.0
    %27 = vst [vmem:[#allocation5] sm:$0xff] %v25
    %28 = vst [vmem:[#allocation5 + $0x8] sm:$0xff] %v26
    // Predicated region
    $region10: #{tpu_custom_call.1} parent=1 // pred_check
      _
    $region11: #{tpu_custom_call.1} parent=1 // pred_check_branch
      %30 = sbr.rel (0) target = $region13
    $region12: #{tpu_custom_call.1} parent=1 // pred_region
      %32 = vsyncadd [#allocation4], 0
      %s34 = sshll.u32 [#allocation5], 4
      %s35 = int_to_ptr.vmem [resolvable:$true] %s34
      %s36 = sshll.u32 %s1, 4
      %s37 = int_to_ptr.hbm [resolvable:$true] %s36
      %39 = dma.vmem_to_hbm [thread:$0]  %s35, 256, %s37, [#allocation4]
    $region13: #{tpu_custom_call.1} parent=1 // pred_fallthru
      _
    // Predicated region
    $region14: #{tpu_custom_call.1} parent=1 // pred_check
      _
    $region15: #{tpu_custom_call.1} parent=1 // pred_check_branch
      %41 = sbr.rel (0) target = $region17
    $region16: #{tpu_custom_call.1} parent=1 // pred_region
      %43 = dma.done [#allocation4], 256
    $region17: #{tpu_custom_call.1} parent=1 // pred_fallthru
      _
    %44 = vsyncpa [#allocation3], 1
    %45 = vsyncpa [#allocation4], 1

</llo_original>
